<compile_context>
chip_gen: v7x
topology: tpu7x:2x2x1
jax: 0.10.0
libtpu: 0.0.40
codegen_flags: <defaults>
</compile_context>

<pallas_src>
import jax
import jax.numpy as jnp
from jax.experimental import pallas as pl
from jax.experimental.pallas import tpu as pltpu

# ---------------------------------------------------------------------------
# Model dims (from the PyTorch module)
# ---------------------------------------------------------------------------
HEALTH_BUCKETS = 4
UTILITY_BUCKETS = 3
INPUT_SIZE = UTILITY_BUCKETS * HEALTH_BUCKETS   # 12
N_OUT = 50                                      # output_size
N_OUT_PAD = 128                                 # lane-dense head (pad 50 -> 128)

# Original (unpadded) layer dims, straight from the PyTorch module.
LAYER_DIMS = [INPUT_SIZE, 256, 256, 256, 128, 128, 64, 32, N_OUT]
N_LAYERS = len(LAYER_DIMS) - 1                  # 8

# Lane-padded per-layer dims: 64/32/50-wide layers padded to 128.
OUT_PAD = [256, 256, 256, 128, 128, 128, 128, N_OUT_PAD]
IN_PAD = [INPUT_SIZE] + OUT_PAD[:-1]            # [12,256,256,256,128,128,128,128]

WEIGHT_DTYPE = jnp.bfloat16
MAX_IN = max(IN_PAD)                            # 256 rows of the packed weight buffer
COL_OFF = [sum(OUT_PAD[:i]) for i in range(N_LAYERS)]   # 128-aligned column offsets
TOTAL_COLS = sum(OUT_PAD)                       # 1408


def _round_up(x, m):
    return ((x + m - 1) // m) * m


def _cdiv(a, b):
    return -(-a // b)


# ---------------------------------------------------------------------------
# Pallas kernel: full MLP forward on one batch tile
# ---------------------------------------------------------------------------
def seq_rl_kernel(x_ref, w_ref, b_ref, o_ref):
    # x_ref: (TILE_B, 12) bf16          activations tile
    # w_ref: (256, 1408)  bf16          all 8 weights packed, VMEM-resident
    # b_ref: (1, 1408)    f32           all 8 biases packed, VMEM-resident
    # o_ref: (TILE_B, 128)              lane-dense padded softmax output
    h = x_ref[...]                                      # bf16
    logits = None
    for li in range(N_LAYERS):
        w = w_ref[:IN_PAD[li], COL_OFF[li]:COL_OFF[li] + OUT_PAD[li]]     # bf16
        b = b_ref[:, COL_OFF[li]:COL_OFF[li] + OUT_PAD[li]]               # f32
        acc = jnp.dot(h, w, preferred_element_type=jnp.float32) + b       # f32 MXU acc
        if li < N_LAYERS - 1:
            # bf16 inter-layer activations: halves VMEM ld/st traffic.
            h = jnp.maximum(acc, 0.0).astype(WEIGHT_DTYPE)
        else:
            logits = acc                                # f32; cols >= 50 are ~ -1e30

    m = jnp.max(logits, axis=-1, keepdims=True)
    e = jnp.exp(logits - m)                             # padded cols -> exp(-huge) = 0
    denom = jnp.sum(e, axis=-1, keepdims=True)
    o_ref[...] = (e / denom).astype(o_ref.dtype)        # exact divide: rows sum to 1


# ---------------------------------------------------------------------------
# Tile-size selection
# ---------------------------------------------------------------------------
def _device_kind():
    try:
        return jax.devices()[0].device_kind.lower()
    except Exception:
        return ""


def _choose_tile_b(B):
    kind = _device_kind()
    is_v5e = ("v5e" in kind) or ("v5 lite" in kind) or ("v5litepod" in kind)
    is_multi_tc = ("v7" in kind) or ("tpu7" in kind)    # v7x: 2 TensorCores per chip
    preferred = 1024 if is_v5e else 2048

    b8 = _round_up(max(B, 1), 8)
    if b8 <= preferred:
        tile = b8                                       # single tile sized from B: no pad waste
    else:
        # Derive the tile from B so padded rows stay well under one tile (<~15%).
        n_tiles = _cdiv(b8, preferred)
        tile = _round_up(_cdiv(b8, n_tiles), 8)

    # v7x: make sure the "parallel" batch axis has >= 2 grid steps whenever
    # there is enough work to split, so both TensorCores get used.
    if is_multi_tc and b8 >= 256:
        if _round_up(b8, tile) // tile < 2:
            tile = _round_up(_cdiv(b8, 2), 8)
    return max(tile, 8)


# ---------------------------------------------------------------------------
# Wrapper: batch grid, resident packed weights/biases, lane-dense padded output
# ---------------------------------------------------------------------------
def seq_rl_forward(x, w_packed, bias_packed, tile_b=None, out_dtype=jnp.float32):
    """x: (B, INPUT_SIZE); w_packed: (256, 1408) bf16; bias_packed: (1, 1408) f32.

    out_dtype=jnp.bfloat16 halves the output HBM store (worth it on v5e);
    default f32 keeps exact probabilities.
    """
    B = x.shape[0]
    if tile_b is None:
        tile_b = _choose_tile_b(B)
    tile_b = max(8, _round_up(tile_b, 8))
    Bp = _round_up(B, tile_b)

    x = x.astype(WEIGHT_DTYPE)                          # bf16 input: halves x DMA
    if Bp != B:
        # Padded rows run a harmless bias-only forward and are sliced away below.
        x = jnp.pad(x, ((0, Bp - B), (0, 0)))
    grid = (Bp // tile_b,)

    in_specs = [
        pl.BlockSpec((tile_b, INPUT_SIZE), lambda i: (i, 0)),         # x tile
        pl.BlockSpec((MAX_IN, TOTAL_COLS), lambda i: (0, 0)),         # resident packed weights
        pl.BlockSpec((1, TOTAL_COLS), lambda i: (0, 0)),              # resident packed biases
    ]
    out_spec = pl.BlockSpec((tile_b, N_OUT_PAD), lambda i: (i, 0))

    flops_per_row = 2 * sum(ip * op for ip, op in zip(IN_PAD, OUT_PAD))
    out_bytes = Bp * N_OUT_PAD * jnp.dtype(out_dtype).itemsize
    cost = pl.CostEstimate(
        flops=Bp * flops_per_row,
        transcendentals=Bp * N_OUT_PAD,
        bytes_accessed=(Bp * INPUT_SIZE * 2            # bf16 x
                        + MAX_IN * TOTAL_COLS * 2      # bf16 packed weights
                        + TOTAL_COLS * 4               # f32 packed biases
                        + out_bytes),
    )

    out_padded = pl.pallas_call(
        seq_rl_kernel,
        out_shape=jax.ShapeDtypeStruct((Bp, N_OUT_PAD), out_dtype),
        grid=grid,
        in_specs=in_specs,
        out_specs=out_spec,
        compiler_params=pltpu.CompilerParams(
            dimension_semantics=("parallel",),          # v7x: shard batch over both TCs
            vmem_limit_bytes=48 * 1024 * 1024,          # headroom for large tiles on v5e
        ),
        cost_estimate=cost,
    )(x, w_packed, bias_packed)

    return out_padded[:B, :N_OUT]


# ---------------------------------------------------------------------------
# Deterministic parameter initialization (PyTorch-style U(-1/sqrt(fan_in), ..))
# ---------------------------------------------------------------------------
def init_params(key, weight_dtype=WEIGHT_DTYPE):
    """Returns (w_packed, bias_packed, params_f32).

    w_packed:    (256, 1408) `weight_dtype`; layer i occupies rows [:fan_in],
                 cols [COL_OFF[i] : COL_OFF[i]+fan_out]; pad entries are zero.
    bias_packed: (1, 1408) f32; head pad cols (50:128 of the last segment) are
                 -1e30 so padded logits vanish under softmax.  Keep f32.
    params_f32:  unpadded f32 (w, b) pairs for the pure-JAX reference.
    """
    w_packed = jnp.zeros((MAX_IN, TOTAL_COLS), jnp.float32)
    bias_packed = jnp.zeros((1, TOTAL_COLS), jnp.float32)
    params_f32 = []
    for i in range(N_LAYERS):
        fan_in, fan_out = LAYER_DIMS[i], LAYER_DIMS[i + 1]
        key, kw, kb = jax.random.split(key, 3)
        bound = 1.0 / (fan_in ** 0.5)
        w = jax.random.uniform(kw, (fan_in, fan_out), jnp.float32, -bound, bound)
        b = jax.random.uniform(kb, (fan_out,), jnp.float32, -bound, bound)
        params_f32.append((w, b))

        w_packed = w_packed.at[:fan_in, COL_OFF[i]:COL_OFF[i] + fan_out].set(w)
        bias_packed = bias_packed.at[0, COL_OFF[i]:COL_OFF[i] + fan_out].set(b)

    # Head lane-pad: zero weight cols (already), -1e30 bias so softmax ignores them.
    bias_packed = bias_packed.at[0, COL_OFF[-1] + N_OUT:COL_OFF[-1] + N_OUT_PAD].set(-1e30)
    return w_packed.astype(weight_dtype), bias_packed, params_f32


# ---------------------------------------------------------------------------
# Reference (pure JAX, f32) for sanity checking
# ---------------------------------------------------------------------------
def seq_rl_reference(x, params_f32):
    h = x
    for i, (w, b) in enumerate(params_f32):
        h = h @ w + b
        if i < len(params_f32) - 1:
            h = jnp.maximum(h, 0.0)
    return jax.nn.softmax(h, axis=-1)


if __name__ == "__main__":
    key = jax.random.PRNGKey(0)
    kp, kx, kx2, kx3 = jax.random.split(key, 4)

    w_packed, bias_packed, params_f32 = init_params(kp)

    # Small batch (matches the shipped usage).
    B = 2
    x = jax.random.normal(kx, (B, INPUT_SIZE), jnp.float32)
    out = jax.block_until_ready(seq_rl_forward(x, w_packed, bias_packed))
    ref = seq_rl_reference(x, params_f32)
    assert out.shape == (B, N_OUT)
    # Exact divide in f32 -> rows sum to 1 tightly.
    assert jnp.allclose(jnp.sum(out, axis=-1), 1.0, atol=1e-3), "softmax rows must sum to 1"
    # bf16 weights + bf16 activations -> compare against the f32 reference loosely.
    assert jnp.allclose(out, ref, atol=3e-2), "mismatch vs f32 reference (B=2)"

    # Multi-step grid path (partial last tile + row padding) with a small tile size.
    B2 = 40
    x2 = jax.random.normal(kx2, (B2, INPUT_SIZE), jnp.float32)
    out2 = jax.block_until_ready(seq_rl_forward(x2, w_packed, bias_packed, tile_b=16))
    ref2 = seq_rl_reference(x2, params_f32)
    assert out2.shape == (B2, N_OUT)
    assert jnp.allclose(jnp.sum(out2, axis=-1), 1.0, atol=1e-3)
    assert jnp.allclose(out2, ref2, atol=3e-2), "mismatch vs f32 reference (B=40, grid>1)"

    # Default (auto) tile selection path.
    B3 = 300
    x3 = jax.random.normal(kx3, (B3, INPUT_SIZE), jnp.float32)
    out3 = jax.block_until_ready(seq_rl_forward(x3, w_packed, bias_packed))
    ref3 = seq_rl_reference(x3, params_f32)
    assert out3.shape == (B3, N_OUT)
    assert jnp.allclose(jnp.sum(out3, axis=-1), 1.0, atol=1e-3)
    assert jnp.allclose(out3, ref3, atol=3e-2), "mismatch vs f32 reference (B=300, auto tile)"

    print("KERNEL_OK")
</pallas_src>

<mosaic_0001>
module attributes {stable_mosaic.version = 11 : i64} {
  func.func @seq_rl_kernel(%arg0: i32, %arg1: memref<8x12xbf16, #tpu.memory_space<vmem>>, %arg2: memref<256x1408xbf16, #tpu.memory_space<vmem>>, %arg3: memref<1x1408xf32, #tpu.memory_space<vmem>>, %arg4: memref<8x128xf32, #tpu.memory_space<vmem>>) attributes {dimension_semantics = [#tpu.dimension_semantics<parallel>], iteration_bounds = array<i64: 1>, scalar_prefetch = 0 : i64, scratch_operands = 0 : i64, tpu.core_type = #tpu.core_type<tc>, window_params = [{transform_indices = @transform_0, window_bounds = array<i64: 8, 12>}, {pipeline_mode = #tpu.pipeline_mode<synchronous>, transform_indices = @transform_1, window_bounds = array<i64: 256, 1408>}, {pipeline_mode = #tpu.pipeline_mode<synchronous>, transform_indices = @transform_2, window_bounds = array<i64: 1, 1408>}, {transform_indices = @transform_3, window_bounds = array<i64: 8, 128>}]} {
    %c0 = arith.constant 0 : index
    %c0_0 = arith.constant 0 : index
    %0 = vector.load %arg1[%c0, %c0_0] : memref<8x12xbf16, #tpu.memory_space<vmem>>, vector<8x12xbf16>
    %c0_1 = arith.constant 0 : index
    %c0_2 = arith.constant 0 : index
    %1 = vector.load %arg2[%c0_1, %c0_2] : memref<256x1408xbf16, #tpu.memory_space<vmem>>, vector<12x256xbf16>
    %c0_3 = arith.constant 0 : index
    %c0_4 = arith.constant 0 : index
    %2 = vector.load %arg3[%c0_3, %c0_4] : memref<1x1408xf32, #tpu.memory_space<vmem>>, vector<1x256xf32>
    %cst = arith.constant dense<0.000000e+00> : vector<8x256xf32>
    %3 = tpu.matmul %0, %1, %cst {dimension_numbers = #tpu.dot_dimension_numbers<[1], [0], [0], [1], [0, 0, 1, 1], [], []>} : vector<8x12xbf16>, vector<12x256xbf16>, vector<8x256xf32> -> vector<8x256xf32>
    %4 = vector.broadcast %2 : vector<1x256xf32> to vector<8x256xf32>
    %5 = arith.addf %3, %4 : vector<8x256xf32>
    %cst_5 = arith.constant 0.000000e+00 : f32
    %6 = vector.broadcast %cst_5 : f32 to vector<8x256xf32>
    %7 = arith.maximumf %5, %6 : vector<8x256xf32>
    %8 = arith.truncf %7 : vector<8x256xf32> to vector<8x256xbf16>
    %c0_6 = arith.constant 0 : index
    %c256 = arith.constant 256 : index
    %9 = vector.load %arg2[%c0_6, %c256] : memref<256x1408xbf16, #tpu.memory_space<vmem>>, vector<256x256xbf16>
    %c0_7 = arith.constant 0 : index
    %c256_8 = arith.constant 256 : index
    %10 = vector.load %arg3[%c0_7, %c256_8] : memref<1x1408xf32, #tpu.memory_space<vmem>>, vector<1x256xf32>
    %cst_9 = arith.constant dense<0.000000e+00> : vector<8x256xf32>
    %11 = tpu.matmul %8, %9, %cst_9 {dimension_numbers = #tpu.dot_dimension_numbers<[1], [0], [0], [1], [0, 0, 1, 1], [], []>} : vector<8x256xbf16>, vector<256x256xbf16>, vector<8x256xf32> -> vector<8x256xf32>
    %12 = vector.broadcast %10 : vector<1x256xf32> to vector<8x256xf32>
    %13 = arith.addf %11, %12 : vector<8x256xf32>
    %cst_10 = arith.constant 0.000000e+00 : f32
    %14 = vector.broadcast %cst_10 : f32 to vector<8x256xf32>
    %15 = arith.maximumf %13, %14 : vector<8x256xf32>
    %16 = arith.truncf %15 : vector<8x256xf32> to vector<8x256xbf16>
    %c0_11 = arith.constant 0 : index
    %c512 = arith.constant 512 : index
    %17 = vector.load %arg2[%c0_11, %c512] : memref<256x1408xbf16, #tpu.memory_space<vmem>>, vector<256x256xbf16>
    %c0_12 = arith.constant 0 : index
    %c512_13 = arith.constant 512 : index
    %18 = vector.load %arg3[%c0_12, %c512_13] : memref<1x1408xf32, #tpu.memory_space<vmem>>, vector<1x256xf32>
    %cst_14 = arith.constant dense<0.000000e+00> : vector<8x256xf32>
    %19 = tpu.matmul %16, %17, %cst_14 {dimension_numbers = #tpu.dot_dimension_numbers<[1], [0], [0], [1], [0, 0, 1, 1], [], []>} : vector<8x256xbf16>, vector<256x256xbf16>, vector<8x256xf32> -> vector<8x256xf32>
    %20 = vector.broadcast %18 : vector<1x256xf32> to vector<8x256xf32>
    %21 = arith.addf %19, %20 : vector<8x256xf32>
    %cst_15 = arith.constant 0.000000e+00 : f32
    %22 = vector.broadcast %cst_15 : f32 to vector<8x256xf32>
    %23 = arith.maximumf %21, %22 : vector<8x256xf32>
    %24 = arith.truncf %23 : vector<8x256xf32> to vector<8x256xbf16>
    %c0_16 = arith.constant 0 : index
    %c768 = arith.constant 768 : index
    %25 = vector.load %arg2[%c0_16, %c768] : memref<256x1408xbf16, #tpu.memory_space<vmem>>, vector<256x128xbf16>
    %c0_17 = arith.constant 0 : index
    %c768_18 = arith.constant 768 : index
    %26 = vector.load %arg3[%c0_17, %c768_18] : memref<1x1408xf32, #tpu.memory_space<vmem>>, vector<1x128xf32>
    %cst_19 = arith.constant dense<0.000000e+00> : vector<8x128xf32>
    %27 = tpu.matmul %24, %25, %cst_19 {dimension_numbers = #tpu.dot_dimension_numbers<[1], [0], [0], [1], [0, 0, 1, 1], [], []>} : vector<8x256xbf16>, vector<256x128xbf16>, vector<8x128xf32> -> vector<8x128xf32>
    %28 = vector.broadcast %26 : vector<1x128xf32> to vector<8x128xf32>
    %29 = arith.addf %27, %28 : vector<8x128xf32>
    %cst_20 = arith.constant 0.000000e+00 : f32
    %30 = vector.broadcast %cst_20 : f32 to vector<8x128xf32>
    %31 = arith.maximumf %29, %30 : vector<8x128xf32>
    %32 = arith.truncf %31 : vector<8x128xf32> to vector<8x128xbf16>
    %c0_21 = arith.constant 0 : index
    %c896 = arith.constant 896 : index
    %33 = vector.load %arg2[%c0_21, %c896] : memref<256x1408xbf16, #tpu.memory_space<vmem>>, vector<128x128xbf16>
    %c0_22 = arith.constant 0 : index
    %c896_23 = arith.constant 896 : index
    %34 = vector.load %arg3[%c0_22, %c896_23] : memref<1x1408xf32, #tpu.memory_space<vmem>>, vector<1x128xf32>
    %cst_24 = arith.constant dense<0.000000e+00> : vector<8x128xf32>
    %35 = tpu.matmul %32, %33, %cst_24 {dimension_numbers = #tpu.dot_dimension_numbers<[1], [0], [0], [1], [0, 0, 1, 1], [], []>} : vector<8x128xbf16>, vector<128x128xbf16>, vector<8x128xf32> -> vector<8x128xf32>
    %36 = vector.broadcast %34 : vector<1x128xf32> to vector<8x128xf32>
    %37 = arith.addf %35, %36 : vector<8x128xf32>
    %cst_25 = arith.constant 0.000000e+00 : f32
    %38 = vector.broadcast %cst_25 : f32 to vector<8x128xf32>
    %39 = arith.maximumf %37, %38 : vector<8x128xf32>
    %40 = arith.truncf %39 : vector<8x128xf32> to vector<8x128xbf16>
    %c0_26 = arith.constant 0 : index
    %c1024 = arith.constant 1024 : index
    %41 = vector.load %arg2[%c0_26, %c1024] : memref<256x1408xbf16, #tpu.memory_space<vmem>>, vector<128x128xbf16>
    %c0_27 = arith.constant 0 : index
    %c1024_28 = arith.constant 1024 : index
    %42 = vector.load %arg3[%c0_27, %c1024_28] : memref<1x1408xf32, #tpu.memory_space<vmem>>, vector<1x128xf32>
    %cst_29 = arith.constant dense<0.000000e+00> : vector<8x128xf32>
    %43 = tpu.matmul %40, %41, %cst_29 {dimension_numbers = #tpu.dot_dimension_numbers<[1], [0], [0], [1], [0, 0, 1, 1], [], []>} : vector<8x128xbf16>, vector<128x128xbf16>, vector<8x128xf32> -> vector<8x128xf32>
    %44 = vector.broadcast %42 : vector<1x128xf32> to vector<8x128xf32>
    %45 = arith.addf %43, %44 : vector<8x128xf32>
    %cst_30 = arith.constant 0.000000e+00 : f32
    %46 = vector.broadcast %cst_30 : f32 to vector<8x128xf32>
    %47 = arith.maximumf %45, %46 : vector<8x128xf32>
    %48 = arith.truncf %47 : vector<8x128xf32> to vector<8x128xbf16>
    %c0_31 = arith.constant 0 : index
    %c1152 = arith.constant 1152 : index
    %49 = vector.load %arg2[%c0_31, %c1152] : memref<256x1408xbf16, #tpu.memory_space<vmem>>, vector<128x128xbf16>
    %c0_32 = arith.constant 0 : index
    %c1152_33 = arith.constant 1152 : index
    %50 = vector.load %arg3[%c0_32, %c1152_33] : memref<1x1408xf32, #tpu.memory_space<vmem>>, vector<1x128xf32>
    %cst_34 = arith.constant dense<0.000000e+00> : vector<8x128xf32>
    %51 = tpu.matmul %48, %49, %cst_34 {dimension_numbers = #tpu.dot_dimension_numbers<[1], [0], [0], [1], [0, 0, 1, 1], [], []>} : vector<8x128xbf16>, vector<128x128xbf16>, vector<8x128xf32> -> vector<8x128xf32>
    %52 = vector.broadcast %50 : vector<1x128xf32> to vector<8x128xf32>
    %53 = arith.addf %51, %52 : vector<8x128xf32>
    %cst_35 = arith.constant 0.000000e+00 : f32
    %54 = vector.broadcast %cst_35 : f32 to vector<8x128xf32>
    %55 = arith.maximumf %53, %54 : vector<8x128xf32>
    %56 = arith.truncf %55 : vector<8x128xf32> to vector<8x128xbf16>
    %c0_36 = arith.constant 0 : index
    %c1280 = arith.constant 1280 : index
    %57 = vector.load %arg2[%c0_36, %c1280] : memref<256x1408xbf16, #tpu.memory_space<vmem>>, vector<128x128xbf16>
    %c0_37 = arith.constant 0 : index
    %c1280_38 = arith.constant 1280 : index
    %58 = vector.load %arg3[%c0_37, %c1280_38] : memref<1x1408xf32, #tpu.memory_space<vmem>>, vector<1x128xf32>
    %cst_39 = arith.constant dense<0.000000e+00> : vector<8x128xf32>
    %59 = tpu.matmul %56, %57, %cst_39 {dimension_numbers = #tpu.dot_dimension_numbers<[1], [0], [0], [1], [0, 0, 1, 1], [], []>} : vector<8x128xbf16>, vector<128x128xbf16>, vector<8x128xf32> -> vector<8x128xf32>
    %60 = vector.broadcast %58 : vector<1x128xf32> to vector<8x128xf32>
    %61 = arith.addf %59, %60 : vector<8x128xf32>
    %cst_40 = arith.constant dense<0xFF800000> : vector<8xf32>
    %62 = vector.multi_reduction <maximumf>, %61, %cst_40 [1] : vector<8x128xf32> to vector<8xf32>
    %63 = vector.shape_cast %62 : vector<8xf32> to vector<8x1xf32>
    %64 = vector.broadcast %63 : vector<8x1xf32> to vector<8x128xf32>
    %65 = arith.subf %61, %64 : vector<8x128xf32>
    %66 = math.exp %65 : vector<8x128xf32>
    %cst_41 = arith.constant dense<0.000000e+00> : vector<8xf32>
    %67 = vector.multi_reduction <add>, %66, %cst_41 [1] : vector<8x128xf32> to vector<8xf32>
    %68 = vector.shape_cast %67 : vector<8xf32> to vector<8x1xf32>
    %69 = vector.broadcast %68 : vector<8x1xf32> to vector<8x128xf32>
    %70 = arith.divf %66, %69 : vector<8x128xf32>
    %c0_42 = arith.constant 0 : index
    %c0_43 = arith.constant 0 : index
    %71 = vector.load %arg4[%c0_42, %c0_43] : memref<8x128xf32, #tpu.memory_space<vmem>>, vector<8x128xf32>
    tpu.vector_store %arg4[%c0_42, %c0_43], %70 {strides = array<i32>} : memref<8x128xf32, #tpu.memory_space<vmem>>, vector<8x128xf32>,
    return
  }
  func.func @transform_0(%arg0: i32) -> (i32, i32) {
    %c0_i32 = arith.constant 0 : i32
    %c0_i32_0 = arith.constant 0 : i32
    return %arg0, %c0_i32 : i32, i32
  }
  func.func @transform_1(%arg0: i32) -> (i32, i32) {
    %c0_i32 = arith.constant 0 : i32
    %c0_i32_0 = arith.constant 0 : i32
    %c0_i32_1 = arith.constant 0 : i32
    return %c0_i32, %c0_i32_0 : i32, i32
  }
  func.func @transform_2(%arg0: i32) -> (i32, i32) {
    %c0_i32 = arith.constant 0 : i32
    %c0_i32_0 = arith.constant 0 : i32
    %c0_i32_1 = arith.constant 0 : i32
    return %c0_i32, %c0_i32_0 : i32, i32
  }
  func.func @transform_3(%arg0: i32) -> (i32, i32) {
    %c0_i32 = arith.constant 0 : i32
    %c0_i32_0 = arith.constant 0 : i32
    return %arg0, %c0_i32 : i32, i32
  }
}

</mosaic_0001>

<llo_original>
// kernel: tpu_custom_call.1
$region0: #{tpu_custom_call.1}
  #allocation0 [shape = 'u32[]', space=smem, size = 0x4, offset = 0x4, fixed_abs, tag = 'smem constant byte address 0x4 - core index']
  #allocation1 [shape = 'u32[144,128]{1,0:T(1,128)}', space=vmem, size = 0x12000, scoped, tag = 'internal scratch']
  %s0 = inlined_call_operand.hbm [shape: bf16[8,12], index: 0, kind: input, shape index: {}]
  %s1 = inlined_call_operand.hbm [shape: bf16[256,1408], index: 1, kind: input, shape index: {}]
  %s2 = inlined_call_operand.hbm [shape: f32[1,1408], index: 2, kind: input, shape index: {}]
  %s3 = inlined_call_operand.hbm [shape: f32[8,128], index: 3, kind: output, shape index: {}]
  %s4 = sld [smem:[#allocation0]]
  $region34: #{tpu_custom_call.1} parent=0
    _
  %s6 = ssub.s32 1, %s4
  %s7 = scalar_select 0, %s6, %s4
  $region1: #{tpu_custom_call.1} parent=0
    #allocation2 [shape = 'u8[2048]{0}', space=vmem, size = 0x800, scoped, tag = 'input window, operand 0, single buffered']
    #allocation3 [shape = 's32[1]{0}', space=sflag, size = 0x4, scoped, tag = 'scoped memory for tpu_custom_call.1']
    #allocation4 [shape = 's32[1]{0}', space=sflag, size = 0x4, scoped, tag = 'scoped memory for tpu_custom_call.1']
    #allocation5 [shape = 'u8[720896]{0}', space=vmem, size = 0xb0000, scoped, tag = 'input window, operand 1, single buffered']
    #allocation6 [shape = 's32[1]{0}', space=sflag, size = 0x4, scoped, tag = 'scoped memory for tpu_custom_call.1']
    #allocation7 [shape = 'u8[5632]{0}', space=vmem, size = 0x1800, scoped, tag = 'input window, operand 2, single buffered']
    #allocation8 [shape = 'u8[4096]{0}', space=vmem, size = 0x1000, scoped, tag = 'output window, operand 0, single buffered']
    %8 = vsyncpa [#allocation3], 0
    %9 = vsyncpa [#allocation6], 0
    %10 = vsyncpa [#allocation4], 0
    // Predicated region
    $region2: #{tpu_custom_call.1} parent=1 // pred_check
      _
    $region3: #{tpu_custom_call.1} parent=1 // pred_check_branch
      %12 = sbr.rel (0) target = $region5
    $region4: #{tpu_custom_call.1} parent=1 // pred_region
      %s14 = ssub.s32 64, 64
      %15 = vsyncadd [#allocation3], %s14
      %s17 = sshll.u32 [#allocation2], 4
      %s18 = int_to_ptr.vmem [resolvable:$true] %s17
      %20 = dma.hbm_to_vmem [thread:$0]  %s0, 64, %s18, [#allocation3]
    $region5: #{tpu_custom_call.1} parent=1 // pred_fallthru
      _
    // Predicated region
    $region6: #{tpu_custom_call.1} parent=1 // pred_check
      _
    $region7: #{tpu_custom_call.1} parent=1 // pred_check_branch
      %22 = sbr.rel (0) target = $region9
    $region8: #{tpu_custom_call.1} parent=1 // pred_region
      %s24 = ssub.s32 22528, 22528
      %25 = vsyncadd [#allocation6], %s24
      %s26 = sshll.u32 [#allocation5], 4
      %s27 = int_to_ptr.vmem [resolvable:$true] %s26
      %32 = dma.hbm_to_vmem [thread:$0]  %s1, 22528, %s27, [#allocation6], 704, 704, 44
    $region9: #{tpu_custom_call.1} parent=1 // pred_fallthru
      _
    // Predicated region
    $region10: #{tpu_custom_call.1} parent=1 // pred_check
      _
    $region11: #{tpu_custom_call.1} parent=1 // pred_check_branch
      %34 = sbr.rel (0) target = $region13
    $region12: #{tpu_custom_call.1} parent=1 // pred_region
      %s36 = ssub.s32 176, 176
      %37 = vsyncadd [#allocation6], %s36
      %s39 = sshll.u32 [#allocation7], 4
      %s40 = int_to_ptr.vmem [resolvable:$true] %s39
      %42 = dma.hbm_to_vmem [thread:$0]  %s2, 176, %s40, [#allocation6]
    $region13: #{tpu_custom_call.1} parent=1 // pred_fallthru
      _
    // Predicated region
    $region14: #{tpu_custom_call.1} parent=1 // pred_check
      _
    $region15: #{tpu_custom_call.1} parent=1 // pred_check_branch
      %44 = sbr.rel (0) target = $region17
    $region16: #{tpu_custom_call.1} parent=1 // pred_region
      %45 = dma.done [#allocation3], 64
    $region17: #{tpu_custom_call.1} parent=1 // pred_fallthru
      _
    // Predicated region
    $region18: #{tpu_custom_call.1} parent=1 // pred_check
      _
    $region19: #{tpu_custom_call.1} parent=1 // pred_check_branch
      %47 = sbr.rel (0) target = $region21
    $region20: #{tpu_custom_call.1} parent=1 // pred_region
      %48 = dma.done [#allocation6], 22528
    $region21: #{tpu_custom_call.1} parent=1 // pred_fallthru
      _
    // Predicated region
    $region22: #{tpu_custom_call.1} parent=1 // pred_check
      _
    $region23: #{tpu_custom_call.1} parent=1 // pred_check_branch
      %50 = sbr.rel (0) target = $region25
    $region24: #{tpu_custom_call.1} parent=1 // pred_region
      %51 = dma.done [#allocation6], 176
    $region25: #{tpu_custom_call.1} parent=1 // pred_fallthru
      _
    %v53 = vld [vmem:[#allocation2] sm:$0xf]
    %v54 = vld [vmem:[#allocation5] sm:$0xff]
    %v55 = vld [vmem:[#allocation5 + $0x2c] sm:$0x33]
    %v56 = vld [vmem:[#allocation7] sm:$0x3]
    %v58 = vlaneseq
    %v59 = vshrl.u32 %v58, 7
    %v60 = vsub.s32 0, %v59
    %v61 = vrot.slane %v56, %v60
    %v62 = vlaneseq
    %v63 = vshrl.u32 %v62, 7
    %v64 = vsub.s32 1, %v63
    %v65 = vrot.slane %v56, %v64
    %v70 = vunpack.c.l.b16 %v54
    %v71 = vunpack.c.h.b16 %v54
    %v72 = vunpack.c.l.b16 %v55
    %v73 = vunpack.c.h.b16 %v55
    %v74 = vpack.c.b16 %v72, %v70
    %v75 = vpack.c.b16 %v73, %v71
    %vm76 = vcmask 97280
    %v78 = vsel %vm76, %v53, 0
    %vm80 = vcmask 1045504
    %v82 = vsel %vm80, %v74, 0
    %v85 = vsel %vm80, %v75, 0
    %87 = vmatprep.subr.bf16.mxu0 %v85
    %88 = vmatpush1.bf16.msra.mxu0 %v82
    %89 = vmatprep.subr.bf16.mxu0 0
    %90 = vmatpush1.bf16.msra.mxu0 0
    %91 = vmatprep.subr.bf16.mxu0 0
    %92 = vmatpush1.bf16.msra.mxu0 0
    %93 = vmatprep.subr.bf16.mxu0 0
    %94 = vmatpush1.bf16.msra.mxu0 0
    %95 = vmatprep.subr.bf16.mxu0 0
    %96 = vmatpush1.bf16.msra.mxu0 0
    %97 = vmatprep.subr.bf16.mxu0 0
    %98 = vmatpush1.bf16.msra.mxu0 0
    %99 = vmatprep.subr.bf16.mxu0 0
    %100 = vmatpush1.bf16.msra.mxu0 0
    %101 = vmatprep.subr.bf16.mxu0 0
    %102 = vmatpush1.bf16.msra.mxu0 0
    %103 = vmatprep.subr.bf16.mxu0 0
    %104 = vmatpush1.bf16.msra.mxu0 0
    %105 = vmatprep.subr.bf16.mxu0 0
    %106 = vmatpush1.bf16.msra.mxu0 0
    %107 = vmatprep.subr.bf16.mxu0 0
    %108 = vmatpush1.bf16.msra.mxu0 0
    %109 = vmatprep.subr.bf16.mxu0 0
    %110 = vmatpush1.bf16.msra.mxu0 0
    %111 = vmatprep.subr.bf16.mxu0 0
    %112 = vmatpush1.bf16.msra.mxu0 0
    %113 = vmatprep.subr.bf16.mxu0 0
    %114 = vmatpush1.bf16.msra.mxu0 0
    %115 = vmatprep.subr.bf16.mxu0 0
    %116 = vmatpush1.bf16.msra.mxu0 0
    %117 = vmatprep.subr.bf16.mxu0 0
    %118 = vmatpush1.bf16.msra.mxu0 0
    %119 = vmatprep.mubr.bf16.mxu0 0
    %120 = vmatmul.mubr.bf16.gmra.mrb[0].mxu0 %v78
    %v121 = vpop.f32.mrb[0].mxu0
    %v122 = vadd.f32 %v61, %v121
    %v123 = vpop.f32.mrb[0].mxu0
    %v124 = vadd.f32 %v65, %v123
    %v125 = vpop.f32.mrb[0].mxu0
    %v126 = vpop.f32.mrb[0].mxu0
    %127 = vdwg.mxu0
    %v128 = vmax.f32 %v122, 0.0
    %v129 = vmax.f32 %v124, 0.0
    %v130 = vpack.c.bf16 %v128, %v128
    %v131 = vpack.c.bf16 %v129, %v129
    %v132 = vld [vmem:[#allocation5 + $0x8] sm:$0xff]
    %v133 = vld [vmem:[#allocation5 + $0x34] sm:$0xff]
    %v134 = vld [vmem:[#allocation5 + $0x60] sm:$0xff]
    %v135 = vld [vmem:[#allocation5 + $0x8c] sm:$0xff]
    %v136 = vld [vmem:[#allocation5 + $0xb8] sm:$0xff]
    %v137 = vld [vmem:[#allocation5 + $0xe4] sm:$0xff]
    %v138 = vld [vmem:[#allocation5 + $0x110] sm:$0xff]
    %v139 = vld [vmem:[#allocation5 + $0x13c] sm:$0xff]
    %v140 = vld [vmem:[#allocation5 + $0x168] sm:$0xff]
    %v141 = vld [vmem:[#allocation5 + $0x194] sm:$0xff]
    %v142 = vld [vmem:[#allocation5 + $0x1c0] sm:$0xff]
    %v143 = vld [vmem:[#allocation5 + $0x1ec] sm:$0xff]
    %v144 = vld [vmem:[#allocation5 + $0x218] sm:$0xff]
    %v145 = vld [vmem:[#allocation5 + $0x244] sm:$0xff]
    %v146 = vld [vmem:[#allocation5 + $0x270] sm:$0xff]
    %v147 = vld [vmem:[#allocation5 + $0x29c] sm:$0xff]
    %v148 = vld [vmem:[#allocation5 + $0x2c8] sm:$0xff]
    %v149 = vld [vmem:[#allocation5 + $0x2f4] sm:$0xff]
    %v150 = vld [vmem:[#allocation5 + $0x320] sm:$0xff]
    %v151 = vld [vmem:[#allocation5 + $0x34c] sm:$0xff]
    %v152 = vld [vmem:[#allocation5 + $0x378] sm:$0xff]
    %v153 = vld [vmem:[#allocation5 + $0x3a4] sm:$0xff]
    %v154 = vld [vmem:[#allocation5 + $0x3d0] sm:$0xff]
    %v155 = vld [vmem:[#allocation5 + $0x3fc] sm:$0xff]
    %v156 = vld [vmem:[#allocation5 + $0x428] sm:$0xff]
    %v157 = vld [vmem:[#allocation5 + $0x454] sm:$0xff]
    %v158 = vld [vmem:[#allocation5 + $0x480] sm:$0xff]
    %v159 = vld [vmem:[#allocation5 + $0x4ac] sm:$0xff]
    %v160 = vld [vmem:[#allocation5 + $0x4d8] sm:$0xff]
    %v161 = vld [vmem:[#allocation5 + $0x504] sm:$0xff]
    %v162 = vld [vmem:[#allocation5 + $0x530] sm:$0xff]
    %v163 = vld [vmem:[#allocation5 + $0x55c] sm:$0xff]
    %v164 = vld [vmem:[#allocation7 + $0x2] sm:$0x3]
    %v166 = vlaneseq
    %v167 = vshrl.u32 %v166, 7
    %v168 = vsub.s32 0, %v167
    %v169 = vrot.slane %v164, %v168
    %v170 = vlaneseq
    %v171 = vshrl.u32 %v170, 7
    %v172 = vsub.s32 1, %v171
    %v173 = vrot.slane %v164, %v172
    %v208 = vunpack.c.l.b16 %v132
    %v209 = vunpack.c.h.b16 %v132
    %v210 = vunpack.c.l.b16 %v133
    %v211 = vunpack.c.h.b16 %v133
    %v212 = vunpack.c.l.b16 %v134
    %v213 = vunpack.c.h.b16 %v134
    %v214 = vunpack.c.l.b16 %v135
    %v215 = vunpack.c.h.b16 %v135
    %v216 = vunpack.c.l.b16 %v136
    %v217 = vunpack.c.h.b16 %v136
    %v218 = vunpack.c.l.b16 %v137
    %v219 = vunpack.c.h.b16 %v137
    %v220 = vunpack.c.l.b16 %v138
    %v221 = vunpack.c.h.b16 %v138
    %v222 = vunpack.c.l.b16 %v139
    %v223 = vunpack.c.h.b16 %v139
    %v224 = vunpack.c.l.b16 %v140
    %v225 = vunpack.c.h.b16 %v140
    %v226 = vunpack.c.l.b16 %v141
    %v227 = vunpack.c.h.b16 %v141
    %v228 = vunpack.c.l.b16 %v142
    %v229 = vunpack.c.h.b16 %v142
    %v230 = vunpack.c.l.b16 %v143
    %v231 = vunpack.c.h.b16 %v143
    %v232 = vunpack.c.l.b16 %v144
    %v233 = vunpack.c.h.b16 %v144
    %v234 = vunpack.c.l.b16 %v145
    %v235 = vunpack.c.h.b16 %v145
    %v236 = vunpack.c.l.b16 %v146
    %v237 = vunpack.c.h.b16 %v146
    %v238 = vunpack.c.l.b16 %v147
    %v239 = vunpack.c.h.b16 %v147
    %v240 = vunpack.c.l.b16 %v148
    %v241 = vunpack.c.h.b16 %v148
    %v242 = vunpack.c.l.b16 %v149
    %v243 = vunpack.c.h.b16 %v149
    %v244 = vunpack.c.l.b16 %v150
    %v245 = vunpack.c.h.b16 %v150
    %v246 = vunpack.c.l.b16 %v151
    %v247 = vunpack.c.h.b16 %v151
    %v248 = vunpack.c.l.b16 %v152
    %v249 = vunpack.c.h.b16 %v152
    %v250 = vunpack.c.l.b16 %v153
    %v251 = vunpack.c.h.b16 %v153
    %v252 = vunpack.c.l.b16 %v154
    %v253 = vunpack.c.h.b16 %v154
    %v254 = vunpack.c.l.b16 %v155
    %v255 = vunpack.c.h.b16 %v155
    %v256 = vunpack.c.l.b16 %v156
    %v257 = vunpack.c.h.b16 %v156
    %v258 = vunpack.c.l.b16 %v157
    %v259 = vunpack.c.h.b16 %v157
    %v260 = vunpack.c.l.b16 %v158
    %v261 = vunpack.c.h.b16 %v158
    %v262 = vunpack.c.l.b16 %v159
    %v263 = vunpack.c.h.b16 %v159
    %v264 = vunpack.c.l.b16 %v160
    %v265 = vunpack.c.h.b16 %v160
    %v266 = vunpack.c.l.b16 %v161
    %v267 = vunpack.c.h.b16 %v161
    %v268 = vunpack.c.l.b16 %v162
    %v269 = vunpack.c.h.b16 %v162
    %v270 = vunpack.c.l.b16 %v163
    %v271 = vunpack.c.h.b16 %v163
    %v272 = vpack.c.b16 %v210, %v208
    %v273 = vpack.c.b16 %v211, %v209
    %v274 = vpack.c.b16 %v214, %v212
    %v275 = vpack.c.b16 %v215, %v213
    %v276 = vpack.c.b16 %v218, %v216
    %v277 = vpack.c.b16 %v219, %v217
    %v278 = vpack.c.b16 %v222, %v220
    %v279 = vpack.c.b16 %v223, %v221
    %v280 = vpack.c.b16 %v226, %v224
    %v281 = vpack.c.b16 %v227, %v225
    %v282 = vpack.c.b16 %v230, %v228
    %v283 = vpack.c.b16 %v231, %v229
    %v284 = vpack.c.b16 %v234, %v232
    %v285 = vpack.c.b16 %v235, %v233
    %v286 = vpack.c.b16 %v238, %v236
    %v287 = vpack.c.b16 %v239, %v237
    %v288 = vpack.c.b16 %v242, %v240
    %v289 = vpack.c.b16 %v243, %v241
    %v290 = vpack.c.b16 %v246, %v244
    %v291 = vpack.c.b16 %v247, %v245
    %v292 = vpack.c.b16 %v250, %v248
    %v293 = vpack.c.b16 %v251, %v249
    %v294 = vpack.c.b16 %v254, %v252
    %v295 = vpack.c.b16 %v255, %v253
    %v296 = vpack.c.b16 %v258, %v256
    %v297 = vpack.c.b16 %v259, %v257
    %v298 = vpack.c.b16 %v262, %v260
    %v299 = vpack.c.b16 %v263, %v261
    %v300 = vpack.c.b16 %v266, %v264
    %v301 = vpack.c.b16 %v267, %v265
    %v302 = vpack.c.b16 %v270, %v268
    %v303 = vpack.c.b16 %v271, %v269
    %336 = vmatprep.subr.bf16.mxu0 %v273
    %337 = vmatpush1.bf16.msra.mxu0 %v272
    %338 = vmatprep.subr.bf16.mxu0 %v275
    %339 = vmatpush1.bf16.msra.mxu0 %v274
    %340 = vmatprep.subr.bf16.mxu0 %v277
    %341 = vmatpush1.bf16.msra.mxu0 %v276
    %342 = vmatprep.subr.bf16.mxu0 %v279
    %343 = vmatpush1.bf16.msra.mxu0 %v278
    %344 = vmatprep.subr.bf16.mxu0 %v281
    %345 = vmatpush1.bf16.msra.mxu0 %v280
    %346 = vmatprep.subr.bf16.mxu0 %v283
    %347 = vmatpush1.bf16.msra.mxu0 %v282
    %348 = vmatprep.subr.bf16.mxu0 %v285
    %349 = vmatpush1.bf16.msra.mxu0 %v284
    %350 = vmatprep.subr.bf16.mxu0 %v287
    %351 = vmatpush1.bf16.msra.mxu0 %v286
    %352 = vmatprep.subr.bf16.mxu0 %v289
    %353 = vmatpush1.bf16.msra.mxu0 %v288
    %354 = vmatprep.subr.bf16.mxu0 %v291
    %355 = vmatpush1.bf16.msra.mxu0 %v290
    %356 = vmatprep.subr.bf16.mxu0 %v293
    %357 = vmatpush1.bf16.msra.mxu0 %v292
    %358 = vmatprep.subr.bf16.mxu0 %v295
    %359 = vmatpush1.bf16.msra.mxu0 %v294
    %360 = vmatprep.subr.bf16.mxu0 %v297
    %361 = vmatpush1.bf16.msra.mxu0 %v296
    %362 = vmatprep.subr.bf16.mxu0 %v299
    %363 = vmatpush1.bf16.msra.mxu0 %v298
    %364 = vmatprep.subr.bf16.mxu0 %v301
    %365 = vmatpush1.bf16.msra.mxu0 %v300
    %366 = vmatprep.subr.bf16.mxu0 %v303
    %367 = vmatpush1.bf16.msra.mxu0 %v302
    %368 = vmatprep.mubr.bf16.mxu0 %v131
    %369 = vmatmul.mubr.bf16.gmra.mrb[0].mxu0 %v130
    %v370 = vpop.f32.mrb[0].mxu0
    %v371 = vadd.f32 %v169, %v370
    %v372 = vpop.f32.mrb[0].mxu0
    %v373 = vadd.f32 %v173, %v372
    %v374 = vpop.f32.mrb[0].mxu0
    %v375 = vpop.f32.mrb[0].mxu0
    %376 = vdwg.mxu0
    %v377 = vmax.f32 %v371, 0.0
    %v378 = vmax.f32 %v373, 0.0
    %v379 = vpack.c.bf16 %v377, %v377
    %v380 = vpack.c.bf16 %v378, %v378
    %v381 = vld [vmem:[#allocation5 + $0x10] sm:$0xff]
    %v382 = vld [vmem:[#allocation5 + $0x3c] sm:$0xff]
    %v383 = vld [vmem:[#allocation5 + $0x68] sm:$0xff]
    %v384 = vld [vmem:[#allocation5 + $0x94] sm:$0xff]
    %v385 = vld [vmem:[#allocation5 + $0xc0] sm:$0xff]
    %v386 = vld [vmem:[#allocation5 + $0xec] sm:$0xff]
    %v387 = vld [vmem:[#allocation5 + $0x118] sm:$0xff]
    %v388 = vld [vmem:[#allocation5 + $0x144] sm:$0xff]
    %v389 = vld [vmem:[#allocation5 + $0x170] sm:$0xff]
    %v390 = vld [vmem:[#allocation5 + $0x19c] sm:$0xff]
    %v391 = vld [vmem:[#allocation5 + $0x1c8] sm:$0xff]
    %v392 = vld [vmem:[#allocation5 + $0x1f4] sm:$0xff]
    %v393 = vld [vmem:[#allocation5 + $0x220] sm:$0xff]
    %v394 = vld [vmem:[#allocation5 + $0x24c] sm:$0xff]
    %v395 = vld [vmem:[#allocation5 + $0x278] sm:$0xff]
    %v396 = vld [vmem:[#allocation5 + $0x2a4] sm:$0xff]
    %v397 = vld [vmem:[#allocation5 + $0x2d0] sm:$0xff]
    %v398 = vld [vmem:[#allocation5 + $0x2fc] sm:$0xff]
    %v399 = vld [vmem:[#allocation5 + $0x328] sm:$0xff]
    %v400 = vld [vmem:[#allocation5 + $0x354] sm:$0xff]
    %v401 = vld [vmem:[#allocation5 + $0x380] sm:$0xff]
    %v402 = vld [vmem:[#allocation5 + $0x3ac] sm:$0xff]
    %v403 = vld [vmem:[#allocation5 + $0x3d8] sm:$0xff]
    %v404 = vld [vmem:[#allocation5 + $0x404] sm:$0xff]
    %v405 = vld [vmem:[#allocation5 + $0x430] sm:$0xff]
    %v406 = vld [vmem:[#allocation5 + $0x45c] sm:$0xff]
    %v407 = vld [vmem:[#allocation5 + $0x488] sm:$0xff]
    %v408 = vld [vmem:[#allocation5 + $0x4b4] sm:$0xff]
    %v409 = vld [vmem:[#allocation5 + $0x4e0] sm:$0xff]
    %v410 = vld [vmem:[#allocation5 + $0x50c] sm:$0xff]
    %v411 = vld [vmem:[#allocation5 + $0x538] sm:$0xff]
    %v412 = vld [vmem:[#allocation5 + $0x564] sm:$0xff]
    %v413 = vld [vmem:[#allocation7 + $0x4] sm:$0x3]
    %v415 = vlaneseq
    %v416 = vshrl.u32 %v415, 7
    %v417 = vsub.s32 0, %v416
    %v418 = vrot.slane %v413, %v417
    %v419 = vlaneseq
    %v420 = vshrl.u32 %v419, 7
    %v421 = vsub.s32 1, %v420
    %v422 = vrot.slane %v413, %v421
    %v457 = vunpack.c.l.b16 %v381
    %v458 = vunpack.c.h.b16 %v381
    %v459 = vunpack.c.l.b16 %v382
    %v460 = vunpack.c.h.b16 %v382
    %v461 = vunpack.c.l.b16 %v383
    %v462 = vunpack.c.h.b16 %v383
    %v463 = vunpack.c.l.b16 %v384
    %v464 = vunpack.c.h.b16 %v384
    %v465 = vunpack.c.l.b16 %v385
    %v466 = vunpack.c.h.b16 %v385
    %v467 = vunpack.c.l.b16 %v386
    %v468 = vunpack.c.h.b16 %v386
    %v469 = vunpack.c.l.b16 %v387
    %v470 = vunpack.c.h.b16 %v387
    %v471 = vunpack.c.l.b16 %v388
    %v472 = vunpack.c.h.b16 %v388
    %v473 = vunpack.c.l.b16 %v389
    %v474 = vunpack.c.h.b16 %v389
    %v475 = vunpack.c.l.b16 %v390
    %v476 = vunpack.c.h.b16 %v390
    %v477 = vunpack.c.l.b16 %v391
    %v478 = vunpack.c.h.b16 %v391
    %v479 = vunpack.c.l.b16 %v392
    %v480 = vunpack.c.h.b16 %v392
    %v481 = vunpack.c.l.b16 %v393
    %v482 = vunpack.c.h.b16 %v393
    %v483 = vunpack.c.l.b16 %v394
    %v484 = vunpack.c.h.b16 %v394
    %v485 = vunpack.c.l.b16 %v395
    %v486 = vunpack.c.h.b16 %v395
    %v487 = vunpack.c.l.b16 %v396
    %v488 = vunpack.c.h.b16 %v396
    %v489 = vunpack.c.l.b16 %v397
    %v490 = vunpack.c.h.b16 %v397
    %v491 = vunpack.c.l.b16 %v398
    %v492 = vunpack.c.h.b16 %v398
    %v493 = vunpack.c.l.b16 %v399
    %v494 = vunpack.c.h.b16 %v399
    %v495 = vunpack.c.l.b16 %v400
    %v496 = vunpack.c.h.b16 %v400
    %v497 = vunpack.c.l.b16 %v401
    %v498 = vunpack.c.h.b16 %v401
    %v499 = vunpack.c.l.b16 %v402
    %v500 = vunpack.c.h.b16 %v402
    %v501 = vunpack.c.l.b16 %v403
    %v502 = vunpack.c.h.b16 %v403
    %v503 = vunpack.c.l.b16 %v404
    %v504 = vunpack.c.h.b16 %v404
    %v505 = vunpack.c.l.b16 %v405
    %v506 = vunpack.c.h.b16 %v405
    %v507 = vunpack.c.l.b16 %v406
    %v508 = vunpack.c.h.b16 %v406
    %v509 = vunpack.c.l.b16 %v407
    %v510 = vunpack.c.h.b16 %v407
    %v511 = vunpack.c.l.b16 %v408
    %v512 = vunpack.c.h.b16 %v408
    %v513 = vunpack.c.l.b16 %v409
    %v514 = vunpack.c.h.b16 %v409
    %v515 = vunpack.c.l.b16 %v410
    %v516 = vunpack.c.h.b16 %v410
    %v517 = vunpack.c.l.b16 %v411
    %v518 = vunpack.c.h.b16 %v411
    %v519 = vunpack.c.l.b16 %v412
    %v520 = vunpack.c.h.b16 %v412
    %v521 = vpack.c.b16 %v459, %v457
    %v522 = vpack.c.b16 %v460, %v458
    %v523 = vpack.c.b16 %v463, %v461
    %v524 = vpack.c.b16 %v464, %v462
    %v525 = vpack.c.b16 %v467, %v465
    %v526 = vpack.c.b16 %v468, %v466
    %v527 = vpack.c.b16 %v471, %v469
    %v528 = vpack.c.b16 %v472, %v470
    %v529 = vpack.c.b16 %v475, %v473
    %v530 = vpack.c.b16 %v476, %v474
    %v531 = vpack.c.b16 %v479, %v477
    %v532 = vpack.c.b16 %v480, %v478
    %v533 = vpack.c.b16 %v483, %v481
    %v534 = vpack.c.b16 %v484, %v482
    %v535 = vpack.c.b16 %v487, %v485
    %v536 = vpack.c.b16 %v488, %v486
    %v537 = vpack.c.b16 %v491, %v489
    %v538 = vpack.c.b16 %v492, %v490
    %v539 = vpack.c.b16 %v495, %v493
    %v540 = vpack.c.b16 %v496, %v494
    %v541 = vpack.c.b16 %v499, %v497
    %v542 = vpack.c.b16 %v500, %v498
    %v543 = vpack.c.b16 %v503, %v501
    %v544 = vpack.c.b16 %v504, %v502
    %v545 = vpack.c.b16 %v507, %v505
    %v546 = vpack.c.b16 %v508, %v506
    %v547 = vpack.c.b16 %v511, %v509
    %v548 = vpack.c.b16 %v512, %v510
    %v549 = vpack.c.b16 %v515, %v513
    %v550 = vpack.c.b16 %v516, %v514
    %v551 = vpack.c.b16 %v519, %v517
    %v552 = vpack.c.b16 %v520, %v518
    %585 = vmatprep.subr.bf16.mxu0 %v522
    %586 = vmatpush1.bf16.msra.mxu0 %v521
    %587 = vmatprep.subr.bf16.mxu0 %v524
    %588 = vmatpush1.bf16.msra.mxu0 %v523
    %589 = vmatprep.subr.bf16.mxu0 %v526
    %590 = vmatpush1.bf16.msra.mxu0 %v525
    %591 = vmatprep.subr.bf16.mxu0 %v528
    %592 = vmatpush1.bf16.msra.mxu0 %v527
    %593 = vmatprep.subr.bf16.mxu0 %v530
    %594 = vmatpush1.bf16.msra.mxu0 %v529
    %595 = vmatprep.subr.bf16.mxu0 %v532
    %596 = vmatpush1.bf16.msra.mxu0 %v531
    %597 = vmatprep.subr.bf16.mxu0 %v534
    %598 = vmatpush1.bf16.msra.mxu0 %v533
    %599 = vmatprep.subr.bf16.mxu0 %v536
    %600 = vmatpush1.bf16.msra.mxu0 %v535
    %601 = vmatprep.subr.bf16.mxu0 %v538
    %602 = vmatpush1.bf16.msra.mxu0 %v537
    %603 = vmatprep.subr.bf16.mxu0 %v540
    %604 = vmatpush1.bf16.msra.mxu0 %v539
    %605 = vmatprep.subr.bf16.mxu0 %v542
    %606 = vmatpush1.bf16.msra.mxu0 %v541
    %607 = vmatprep.subr.bf16.mxu0 %v544
    %608 = vmatpush1.bf16.msra.mxu0 %v543
    %609 = vmatprep.subr.bf16.mxu0 %v546
    %610 = vmatpush1.bf16.msra.mxu0 %v545
    %611 = vmatprep.subr.bf16.mxu0 %v548
    %612 = vmatpush1.bf16.msra.mxu0 %v547
    %613 = vmatprep.subr.bf16.mxu0 %v550
    %614 = vmatpush1.bf16.msra.mxu0 %v549
    %615 = vmatprep.subr.bf16.mxu0 %v552
    %616 = vmatpush1.bf16.msra.mxu0 %v551
    %617 = vmatprep.mubr.bf16.mxu0 %v380
    %618 = vmatmul.mubr.bf16.gmra.mrb[0].mxu0 %v379
    %v619 = vpop.f32.mrb[0].mxu0
    %v620 = vadd.f32 %v418, %v619
    %v621 = vpop.f32.mrb[0].mxu0
    %v622 = vadd.f32 %v422, %v621
    %v623 = vpop.f32.mrb[0].mxu0
    %v624 = vpop.f32.mrb[0].mxu0
    %625 = vdwg.mxu0
    %v626 = vmax.f32 %v620, 0.0
    %v627 = vmax.f32 %v622, 0.0
    %v628 = vpack.c.bf16 %v626, %v626
    %v629 = vpack.c.bf16 %v627, %v627
    %v630 = vld [vmem:[#allocation5 + $0x18] sm:$0xf]
    %v631 = vld [vmem:[#allocation5 + $0x44] sm:$0xf]
    %v632 = vld [vmem:[#allocation5 + $0x70] sm:$0xf]
    %v633 = vld [vmem:[#allocation5 + $0x9c] sm:$0xf]
    %v634 = vld [vmem:[#allocation5 + $0xc8] sm:$0xf]
    %v635 = vld [vmem:[#allocation5 + $0xf4] sm:$0xf]
    %v636 = vld [vmem:[#allocation5 + $0x120] sm:$0xf]
    %v637 = vld [vmem:[#allocation5 + $0x14c] sm:$0xf]
    %v638 = vld [vmem:[#allocation5 + $0x178] sm:$0xf]
    %v639 = vld [vmem:[#allocation5 + $0x1a4] sm:$0xf]
    %v640 = vld [vmem:[#allocation5 + $0x1d0] sm:$0xf]
    %v641 = vld [vmem:[#allocation5 + $0x1fc] sm:$0xf]
    %v642 = vld [vmem:[#allocation5 + $0x228] sm:$0xf]
    %v643 = vld [vmem:[#allocation5 + $0x254] sm:$0xf]
    %v644 = vld [vmem:[#allocation5 + $0x280] sm:$0xf]
    %v645 = vld [vmem:[#allocation5 + $0x2ac] sm:$0xf]
    %v646 = vld [vmem:[#allocation5 + $0x2d8] sm:$0xf]
    %v647 = vld [vmem:[#allocation5 + $0x304] sm:$0xf]
    %v648 = vld [vmem:[#allocation5 + $0x330] sm:$0xf]
    %v649 = vld [vmem:[#allocation5 + $0x35c] sm:$0xf]
    %v650 = vld [vmem:[#allocation5 + $0x388] sm:$0xf]
    %v651 = vld [vmem:[#allocation5 + $0x3b4] sm:$0xf]
    %v652 = vld [vmem:[#allocation5 + $0x3e0] sm:$0xf]
    %v653 = vld [vmem:[#allocation5 + $0x40c] sm:$0xf]
    %v654 = vld [vmem:[#allocation5 + $0x438] sm:$0xf]
    %v655 = vld [vmem:[#allocation5 + $0x464] sm:$0xf]
    %v656 = vld [vmem:[#allocation5 + $0x490] sm:$0xf]
    %v657 = vld [vmem:[#allocation5 + $0x4bc] sm:$0xf]
    %v658 = vld [vmem:[#allocation5 + $0x4e8] sm:$0xf]
    %v659 = vld [vmem:[#allocation5 + $0x514] sm:$0xf]
    %v660 = vld [vmem:[#allocation5 + $0x540] sm:$0xf]
    %v661 = vld [vmem:[#allocation5 + $0x56c] sm:$0xf]
    %v662 = vld [vmem:[#allocation7 + $0x6] sm:$0x1]
    %v664 = vlaneseq
    %v665 = vshrl.u32 %v664, 7
    %v666 = vsub.s32 0, %v665
    %v667 = vrot.slane %v662, %v666
    %v701 = vunpack.c.l.b16 %v630
    %v702 = vunpack.c.l.b16 %v631
    %v703 = vunpack.c.l.b16 %v632
    %v704 = vunpack.c.l.b16 %v633
    %v705 = vunpack.c.l.b16 %v634
    %v706 = vunpack.c.l.b16 %v635
    %v707 = vunpack.c.l.b16 %v636
    %v708 = vunpack.c.l.b16 %v637
    %v709 = vunpack.c.l.b16 %v638
    %v710 = vunpack.c.l.b16 %v639
    %v711 = vunpack.c.l.b16 %v640
    %v712 = vunpack.c.l.b16 %v641
    %v713 = vunpack.c.l.b16 %v642
    %v714 = vunpack.c.l.b16 %v643
    %v715 = vunpack.c.l.b16 %v644
    %v716 = vunpack.c.l.b16 %v645
    %v717 = vunpack.c.l.b16 %v646
    %v718 = vunpack.c.l.b16 %v647
    %v719 = vunpack.c.l.b16 %v648
    %v720 = vunpack.c.l.b16 %v649
    %v721 = vunpack.c.l.b16 %v650
    %v722 = vunpack.c.l.b16 %v651
    %v723 = vunpack.c.l.b16 %v652
    %v724 = vunpack.c.l.b16 %v653
    %v725 = vunpack.c.l.b16 %v654
    %v726 = vunpack.c.l.b16 %v655
    %v727 = vunpack.c.l.b16 %v656
    %v728 = vunpack.c.l.b16 %v657
    %v729 = vunpack.c.l.b16 %v658
    %v730 = vunpack.c.l.b16 %v659
    %v731 = vunpack.c.l.b16 %v660
    %v732 = vunpack.c.l.b16 %v661
    %v733 = vpack.c.b16 %v702, %v701
    %v734 = vpack.c.b16 %v704, %v703
    %v735 = vpack.c.b16 %v706, %v705
    %v736 = vpack.c.b16 %v708, %v707
    %v737 = vpack.c.b16 %v710, %v709
    %v738 = vpack.c.b16 %v712, %v711
    %v739 = vpack.c.b16 %v714, %v713
    %v740 = vpack.c.b16 %v716, %v715
    %v741 = vpack.c.b16 %v718, %v717
    %v742 = vpack.c.b16 %v720, %v719
    %v743 = vpack.c.b16 %v722, %v721
    %v744 = vpack.c.b16 %v724, %v723
    %v745 = vpack.c.b16 %v726, %v725
    %v746 = vpack.c.b16 %v728, %v727
    %v747 = vpack.c.b16 %v730, %v729
    %v748 = vpack.c.b16 %v732, %v731
    %765 = vmatprep.subr.bf16.mxu0 0
    %766 = vmatpush1.bf16.msra.mxu0 %v733
    %767 = vmatprep.subr.bf16.mxu0 0
    %768 = vmatpush1.bf16.msra.mxu0 %v734
    %769 = vmatprep.subr.bf16.mxu0 0
    %770 = vmatpush1.bf16.msra.mxu0 %v735
    %771 = vmatprep.subr.bf16.mxu0 0
    %772 = vmatpush1.bf16.msra.mxu0 %v736
    %773 = vmatprep.subr.bf16.mxu0 0
    %774 = vmatpush1.bf16.msra.mxu0 %v737
    %775 = vmatprep.subr.bf16.mxu0 0
    %776 = vmatpush1.bf16.msra.mxu0 %v738
    %777 = vmatprep.subr.bf16.mxu0 0
    %778 = vmatpush1.bf16.msra.mxu0 %v739
    %779 = vmatprep.subr.bf16.mxu0 0
    %780 = vmatpush1.bf16.msra.mxu0 %v740
    %781 = vmatprep.subr.bf16.mxu0 0
    %782 = vmatpush1.bf16.msra.mxu0 %v741
    %783 = vmatprep.subr.bf16.mxu0 0
    %784 = vmatpush1.bf16.msra.mxu0 %v742
    %785 = vmatprep.subr.bf16.mxu0 0
    %786 = vmatpush1.bf16.msra.mxu0 %v743
    %787 = vmatprep.subr.bf16.mxu0 0
    %788 = vmatpush1.bf16.msra.mxu0 %v744
    %789 = vmatprep.subr.bf16.mxu0 0
    %790 = vmatpush1.bf16.msra.mxu0 %v745
    %791 = vmatprep.subr.bf16.mxu0 0
    %792 = vmatpush1.bf16.msra.mxu0 %v746
    %793 = vmatprep.subr.bf16.mxu0 0
    %794 = vmatpush1.bf16.msra.mxu0 %v747
    %795 = vmatprep.subr.bf16.mxu0 0
    %796 = vmatpush1.bf16.msra.mxu0 %v748
    %797 = vmatprep.mubr.bf16.mxu0 %v629
    %798 = vmatmul.mubr.bf16.gmra.mrb[0].mxu0 %v628
    %v799 = vpop.f32.mrb[0].mxu0
    %v800 = vadd.f32 %v667, %v799
    %v801 = vpop.f32.mrb[0].mxu0
    %v802 = vpop.f32.mrb[0].mxu0
    %v803 = vpop.f32.mrb[0].mxu0
    %804 = vdwg.mxu0
    %v805 = vmax.f32 %v800, 0.0
    %v806 = vpack.c.bf16 %v805, %v805
    %v807 = vld [vmem:[#allocation5 + $0x1c] sm:$0xf]
    %v808 = vld [vmem:[#allocation5 + $0x48] sm:$0xf]
    %v809 = vld [vmem:[#allocation5 + $0x74] sm:$0xf]
    %v810 = vld [vmem:[#allocation5 + $0xa0] sm:$0xf]
    %v811 = vld [vmem:[#allocation5 + $0xcc] sm:$0xf]
    %v812 = vld [vmem:[#allocation5 + $0xf8] sm:$0xf]
    %v813 = vld [vmem:[#allocation5 + $0x124] sm:$0xf]
    %v814 = vld [vmem:[#allocation5 + $0x150] sm:$0xf]
    %v815 = vld [vmem:[#allocation5 + $0x17c] sm:$0xf]
    %v816 = vld [vmem:[#allocation5 + $0x1a8] sm:$0xf]
    %v817 = vld [vmem:[#allocation5 + $0x1d4] sm:$0xf]
    %v818 = vld [vmem:[#allocation5 + $0x200] sm:$0xf]
    %v819 = vld [vmem:[#allocation5 + $0x22c] sm:$0xf]
    %v820 = vld [vmem:[#allocation5 + $0x258] sm:$0xf]
    %v821 = vld [vmem:[#allocation5 + $0x284] sm:$0xf]
    %v822 = vld [vmem:[#allocation5 + $0x2b0] sm:$0xf]
    %v823 = vld [vmem:[#allocation7 + $0x7] sm:$0x1]
    %v825 = vlaneseq
    %v826 = vshrl.u32 %v825, 7
    %v827 = vsub.s32 0, %v826
    %v828 = vrot.slane %v823, %v827
    %v846 = vunpack.c.l.b16 %v807
    %v847 = vunpack.c.l.b16 %v808
    %v848 = vunpack.c.l.b16 %v809
    %v849 = vunpack.c.l.b16 %v810
    %v850 = vunpack.c.l.b16 %v811
    %v851 = vunpack.c.l.b16 %v812
    %v852 = vunpack.c.l.b16 %v813
    %v853 = vunpack.c.l.b16 %v814
    %v854 = vunpack.c.l.b16 %v815
    %v855 = vunpack.c.l.b16 %v816
    %v856 = vunpack.c.l.b16 %v817
    %v857 = vunpack.c.l.b16 %v818
    %v858 = vunpack.c.l.b16 %v819
    %v859 = vunpack.c.l.b16 %v820
    %v860 = vunpack.c.l.b16 %v821
    %v861 = vunpack.c.l.b16 %v822
    %v862 = vpack.c.b16 %v847, %v846
    %v863 = vpack.c.b16 %v849, %v848
    %v864 = vpack.c.b16 %v851, %v850
    %v865 = vpack.c.b16 %v853, %v852
    %v866 = vpack.c.b16 %v855, %v854
    %v867 = vpack.c.b16 %v857, %v856
    %v868 = vpack.c.b16 %v859, %v858
    %v869 = vpack.c.b16 %v861, %v860
    %878 = vmatprep.subr.bf16.mxu0 0
    %879 = vmatpush1.bf16.msra.mxu0 %v862
    %880 = vmatprep.subr.bf16.mxu0 0
    %881 = vmatpush1.bf16.msra.mxu0 %v863
    %882 = vmatprep.subr.bf16.mxu0 0
    %883 = vmatpush1.bf16.msra.mxu0 %v864
    %884 = vmatprep.subr.bf16.mxu0 0
    %885 = vmatpush1.bf16.msra.mxu0 %v865
    %886 = vmatprep.subr.bf16.mxu0 0
    %887 = vmatpush1.bf16.msra.mxu0 %v866
    %888 = vmatprep.subr.bf16.mxu0 0
    %889 = vmatpush1.bf16.msra.mxu0 %v867
    %890 = vmatprep.subr.bf16.mxu0 0
    %891 = vmatpush1.bf16.msra.mxu0 %v868
    %892 = vmatprep.subr.bf16.mxu0 0
    %893 = vmatpush1.bf16.msra.mxu0 %v869
    %894 = vmatprep.subr.bf16.mxu0 0
    %895 = vmatpush1.bf16.msra.mxu0 0
    %896 = vmatprep.subr.bf16.mxu0 0
    %897 = vmatpush1.bf16.msra.mxu0 0
    %898 = vmatprep.subr.bf16.mxu0 0
    %899 = vmatpush1.bf16.msra.mxu0 0
    %900 = vmatprep.subr.bf16.mxu0 0
    %901 = vmatpush1.bf16.msra.mxu0 0
    %902 = vmatprep.subr.bf16.mxu0 0
    %903 = vmatpush1.bf16.msra.mxu0 0
    %904 = vmatprep.subr.bf16.mxu0 0
    %905 = vmatpush1.bf16.msra.mxu0 0
    %906 = vmatprep.subr.bf16.mxu0 0
    %907 = vmatpush1.bf16.msra.mxu0 0
    %908 = vmatprep.subr.bf16.mxu0 0
    %909 = vmatpush1.bf16.msra.mxu0 0
    %910 = vmatprep.mubr.bf16.mxu0 0
    %911 = vmatmul.mubr.bf16.gmra.mrb[0].mxu0 %v806
    %v912 = vpop.f32.mrb[0].mxu0
    %v913 = vadd.f32 %v828, %v912
    %v914 = vpop.f32.mrb[0].mxu0
    %v915 = vpop.f32.mrb[0].mxu0
    %v916 = vpop.f32.mrb[0].mxu0
    %917 = vdwg.mxu0
    %v918 = vmax.f32 %v913, 0.0
    %v919 = vpack.c.bf16 %v918, %v918
    %v920 = vld [vmem:[#allocation5 + $0x20] sm:$0xf]
    %v921 = vld [vmem:[#allocation5 + $0x4c] sm:$0xf]
    %v922 = vld [vmem:[#allocation5 + $0x78] sm:$0xf]
    %v923 = vld [vmem:[#allocation5 + $0xa4] sm:$0xf]
    %v924 = vld [vmem:[#allocation5 + $0xd0] sm:$0xf]
    %v925 = vld [vmem:[#allocation5 + $0xfc] sm:$0xf]
    %v926 = vld [vmem:[#allocation5 + $0x128] sm:$0xf]
    %v927 = vld [vmem:[#allocation5 + $0x154] sm:$0xf]
    %v928 = vld [vmem:[#allocation5 + $0x180] sm:$0xf]
    %v929 = vld [vmem:[#allocation5 + $0x1ac] sm:$0xf]
    %v930 = vld [vmem:[#allocation5 + $0x1d8] sm:$0xf]
    %v931 = vld [vmem:[#allocation5 + $0x204] sm:$0xf]
    %v932 = vld [vmem:[#allocation5 + $0x230] sm:$0xf]
    %v933 = vld [vmem:[#allocation5 + $0x25c] sm:$0xf]
    %v934 = vld [vmem:[#allocation5 + $0x288] sm:$0xf]
    %v935 = vld [vmem:[#allocation5 + $0x2b4] sm:$0xf]
    %v936 = vld [vmem:[#allocation7 + $0x8] sm:$0x1]
    %v938 = vlaneseq
    %v939 = vshrl.u32 %v938, 7
    %v940 = vsub.s32 0, %v939
    %v941 = vrot.slane %v936, %v940
    %v959 = vunpack.c.l.b16 %v920
    %v960 = vunpack.c.l.b16 %v921
    %v961 = vunpack.c.l.b16 %v922
    %v962 = vunpack.c.l.b16 %v923
    %v963 = vunpack.c.l.b16 %v924
    %v964 = vunpack.c.l.b16 %v925
    %v965 = vunpack.c.l.b16 %v926
    %v966 = vunpack.c.l.b16 %v927
    %v967 = vunpack.c.l.b16 %v928
    %v968 = vunpack.c.l.b16 %v929
    %v969 = vunpack.c.l.b16 %v930
    %v970 = vunpack.c.l.b16 %v931
    %v971 = vunpack.c.l.b16 %v932
    %v972 = vunpack.c.l.b16 %v933
    %v973 = vunpack.c.l.b16 %v934
    %v974 = vunpack.c.l.b16 %v935
    %v975 = vpack.c.b16 %v960, %v959
    %v976 = vpack.c.b16 %v962, %v961
    %v977 = vpack.c.b16 %v964, %v963
    %v978 = vpack.c.b16 %v966, %v965
    %v979 = vpack.c.b16 %v968, %v967
    %v980 = vpack.c.b16 %v970, %v969
    %v981 = vpack.c.b16 %v972, %v971
    %v982 = vpack.c.b16 %v974, %v973
    %991 = vmatprep.subr.bf16.mxu0 0
    %992 = vmatpush1.bf16.msra.mxu0 %v975
    %993 = vmatprep.subr.bf16.mxu0 0
    %994 = vmatpush1.bf16.msra.mxu0 %v976
    %995 = vmatprep.subr.bf16.mxu0 0
    %996 = vmatpush1.bf16.msra.mxu0 %v977
    %997 = vmatprep.subr.bf16.mxu0 0
    %998 = vmatpush1.bf16.msra.mxu0 %v978
    %999 = vmatprep.subr.bf16.mxu0 0
    %1000 = vmatpush1.bf16.msra.mxu0 %v979
    %1001 = vmatprep.subr.bf16.mxu0 0
    %1002 = vmatpush1.bf16.msra.mxu0 %v980
    %1003 = vmatprep.subr.bf16.mxu0 0
    %1004 = vmatpush1.bf16.msra.mxu0 %v981
    %1005 = vmatprep.subr.bf16.mxu0 0
    %1006 = vmatpush1.bf16.msra.mxu0 %v982
    %1007 = vmatprep.subr.bf16.mxu0 0
    %1008 = vmatpush1.bf16.msra.mxu0 0
    %1009 = vmatprep.subr.bf16.mxu0 0
    %1010 = vmatpush1.bf16.msra.mxu0 0
    %1011 = vmatprep.subr.bf16.mxu0 0
    %1012 = vmatpush1.bf16.msra.mxu0 0
    %1013 = vmatprep.subr.bf16.mxu0 0
    %1014 = vmatpush1.bf16.msra.mxu0 0
    %1015 = vmatprep.subr.bf16.mxu0 0
    %1016 = vmatpush1.bf16.msra.mxu0 0
    %1017 = vmatprep.subr.bf16.mxu0 0
    %1018 = vmatpush1.bf16.msra.mxu0 0
    %1019 = vmatprep.subr.bf16.mxu0 0
    %1020 = vmatpush1.bf16.msra.mxu0 0
    %1021 = vmatprep.subr.bf16.mxu0 0
    %1022 = vmatpush1.bf16.msra.mxu0 0
    %1023 = vmatprep.mubr.bf16.mxu0 0
    %1024 = vmatmul.mubr.bf16.gmra.mrb[0].mxu0 %v919
    %v1025 = vpop.f32.mrb[0].mxu0
    %v1026 = vadd.f32 %v941, %v1025
    %v1027 = vpop.f32.mrb[0].mxu0
    %v1028 = vpop.f32.mrb[0].mxu0
    %v1029 = vpop.f32.mrb[0].mxu0
    %1030 = vdwg.mxu0
    %v1031 = vmax.f32 %v1026, 0.0
    %v1032 = vpack.c.bf16 %v1031, %v1031
    %v1033 = vld [vmem:[#allocation5 + $0x24] sm:$0xf]
    %v1034 = vld [vmem:[#allocation5 + $0x50] sm:$0xf]
    %v1035 = vld [vmem:[#allocation5 + $0x7c] sm:$0xf]
    %v1036 = vld [vmem:[#allocation5 + $0xa8] sm:$0xf]
    %v1037 = vld [vmem:[#allocation5 + $0xd4] sm:$0xf]
    %v1038 = vld [vmem:[#allocation5 + $0x100] sm:$0xf]
    %v1039 = vld [vmem:[#allocation5 + $0x12c] sm:$0xf]
    %v1040 = vld [vmem:[#allocation5 + $0x158] sm:$0xf]
    %v1041 = vld [vmem:[#allocation5 + $0x184] sm:$0xf]
    %v1042 = vld [vmem:[#allocation5 + $0x1b0] sm:$0xf]
    %v1043 = vld [vmem:[#allocation5 + $0x1dc] sm:$0xf]
    %v1044 = vld [vmem:[#allocation5 + $0x208] sm:$0xf]
    %v1045 = vld [vmem:[#allocation5 + $0x234] sm:$0xf]
    %v1046 = vld [vmem:[#allocation5 + $0x260] sm:$0xf]
    %v1047 = vld [vmem:[#allocation5 + $0x28c] sm:$0xf]
    %v1048 = vld [vmem:[#allocation5 + $0x2b8] sm:$0xf]
    %v1049 = vld [vmem:[#allocation7 + $0x9] sm:$0x1]
    %v1051 = vlaneseq
    %v1052 = vshrl.u32 %v1051, 7
    %v1053 = vsub.s32 0, %v1052
    %v1054 = vrot.slane %v1049, %v1053
    %v1072 = vunpack.c.l.b16 %v1033
    %v1073 = vunpack.c.l.b16 %v1034
    %v1074 = vunpack.c.l.b16 %v1035
    %v1075 = vunpack.c.l.b16 %v1036
    %v1076 = vunpack.c.l.b16 %v1037
    %v1077 = vunpack.c.l.b16 %v1038
    %v1078 = vunpack.c.l.b16 %v1039
    %v1079 = vunpack.c.l.b16 %v1040
    %v1080 = vunpack.c.l.b16 %v1041
    %v1081 = vunpack.c.l.b16 %v1042
    %v1082 = vunpack.c.l.b16 %v1043
    %v1083 = vunpack.c.l.b16 %v1044
    %v1084 = vunpack.c.l.b16 %v1045
    %v1085 = vunpack.c.l.b16 %v1046
    %v1086 = vunpack.c.l.b16 %v1047
    %v1087 = vunpack.c.l.b16 %v1048
    %v1088 = vpack.c.b16 %v1073, %v1072
    %v1089 = vpack.c.b16 %v1075, %v1074
    %v1090 = vpack.c.b16 %v1077, %v1076
    %v1091 = vpack.c.b16 %v1079, %v1078
    %v1092 = vpack.c.b16 %v1081, %v1080
    %v1093 = vpack.c.b16 %v1083, %v1082
    %v1094 = vpack.c.b16 %v1085, %v1084
    %v1095 = vpack.c.b16 %v1087, %v1086
    %1104 = vmatprep.subr.bf16.mxu0 0
    %1105 = vmatpush1.bf16.msra.mxu0 %v1088
    %1106 = vmatprep.subr.bf16.mxu0 0
    %1107 = vmatpush1.bf16.msra.mxu0 %v1089
    %1108 = vmatprep.subr.bf16.mxu0 0
    %1109 = vmatpush1.bf16.msra.mxu0 %v1090
    %1110 = vmatprep.subr.bf16.mxu0 0
    %1111 = vmatpush1.bf16.msra.mxu0 %v1091
    %1112 = vmatprep.subr.bf16.mxu0 0
    %1113 = vmatpush1.bf16.msra.mxu0 %v1092
    %1114 = vmatprep.subr.bf16.mxu0 0
    %1115 = vmatpush1.bf16.msra.mxu0 %v1093
    %1116 = vmatprep.subr.bf16.mxu0 0
    %1117 = vmatpush1.bf16.msra.mxu0 %v1094
    %1118 = vmatprep.subr.bf16.mxu0 0
    %1119 = vmatpush1.bf16.msra.mxu0 %v1095
    %1120 = vmatprep.subr.bf16.mxu0 0
    %1121 = vmatpush1.bf16.msra.mxu0 0
    %1122 = vmatprep.subr.bf16.mxu0 0
    %1123 = vmatpush1.bf16.msra.mxu0 0
    %1124 = vmatprep.subr.bf16.mxu0 0
    %1125 = vmatpush1.bf16.msra.mxu0 0
    %1126 = vmatprep.subr.bf16.mxu0 0
    %1127 = vmatpush1.bf16.msra.mxu0 0
    %1128 = vmatprep.subr.bf16.mxu0 0
    %1129 = vmatpush1.bf16.msra.mxu0 0
    %1130 = vmatprep.subr.bf16.mxu0 0
    %1131 = vmatpush1.bf16.msra.mxu0 0
    %1132 = vmatprep.subr.bf16.mxu0 0
    %1133 = vmatpush1.bf16.msra.mxu0 0
    %1134 = vmatprep.subr.bf16.mxu0 0
    %1135 = vmatpush1.bf16.msra.mxu0 0
    %1136 = vmatprep.mubr.bf16.mxu0 0
    %1137 = vmatmul.mubr.bf16.gmra.mrb[0].mxu0 %v1032
    %v1138 = vpop.f32.mrb[0].mxu0
    %v1139 = vadd.f32 %v1054, %v1138
    %v1140 = vpop.f32.mrb[0].mxu0
    %v1141 = vpop.f32.mrb[0].mxu0
    %v1142 = vpop.f32.mrb[0].mxu0
    %1143 = vdwg.mxu0
    %v1144 = vmax.f32 %v1139, 0.0
    %v1145 = vpack.c.bf16 %v1144, %v1144
    %v1146 = vld [vmem:[#allocation5 + $0x28] sm:$0xf]
    %v1147 = vld [vmem:[#allocation5 + $0x54] sm:$0xf]
    %v1148 = vld [vmem:[#allocation5 + $0x80] sm:$0xf]
    %v1149 = vld [vmem:[#allocation5 + $0xac] sm:$0xf]
    %v1150 = vld [vmem:[#allocation5 + $0xd8] sm:$0xf]
    %v1151 = vld [vmem:[#allocation5 + $0x104] sm:$0xf]
    %v1152 = vld [vmem:[#allocation5 + $0x130] sm:$0xf]
    %v1153 = vld [vmem:[#allocation5 + $0x15c] sm:$0xf]
    %v1154 = vld [vmem:[#allocation5 + $0x188] sm:$0xf]
    %v1155 = vld [vmem:[#allocation5 + $0x1b4] sm:$0xf]
    %v1156 = vld [vmem:[#allocation5 + $0x1e0] sm:$0xf]
    %v1157 = vld [vmem:[#allocation5 + $0x20c] sm:$0xf]
    %v1158 = vld [vmem:[#allocation5 + $0x238] sm:$0xf]
    %v1159 = vld [vmem:[#allocation5 + $0x264] sm:$0xf]
    %v1160 = vld [vmem:[#allocation5 + $0x290] sm:$0xf]
    %v1161 = vld [vmem:[#allocation5 + $0x2bc] sm:$0xf]
    %v1162 = vld [vmem:[#allocation7 + $0xa] sm:$0x1]
    %v1164 = vlaneseq
    %v1165 = vshrl.u32 %v1164, 7
    %v1166 = vsub.s32 0, %v1165
    %v1167 = vrot.slane %v1162, %v1166
    %v1185 = vunpack.c.l.b16 %v1146
    %v1186 = vunpack.c.l.b16 %v1147
    %v1187 = vunpack.c.l.b16 %v1148
    %v1188 = vunpack.c.l.b16 %v1149
    %v1189 = vunpack.c.l.b16 %v1150
    %v1190 = vunpack.c.l.b16 %v1151
    %v1191 = vunpack.c.l.b16 %v1152
    %v1192 = vunpack.c.l.b16 %v1153
    %v1193 = vunpack.c.l.b16 %v1154
    %v1194 = vunpack.c.l.b16 %v1155
    %v1195 = vunpack.c.l.b16 %v1156
    %v1196 = vunpack.c.l.b16 %v1157
    %v1197 = vunpack.c.l.b16 %v1158
    %v1198 = vunpack.c.l.b16 %v1159
    %v1199 = vunpack.c.l.b16 %v1160
    %v1200 = vunpack.c.l.b16 %v1161
    %v1201 = vpack.c.b16 %v1186, %v1185
    %v1202 = vpack.c.b16 %v1188, %v1187
    %v1203 = vpack.c.b16 %v1190, %v1189
    %v1204 = vpack.c.b16 %v1192, %v1191
    %v1205 = vpack.c.b16 %v1194, %v1193
    %v1206 = vpack.c.b16 %v1196, %v1195
    %v1207 = vpack.c.b16 %v1198, %v1197
    %v1208 = vpack.c.b16 %v1200, %v1199
    %1217 = vmatprep.subr.bf16.mxu0 0
    %1218 = vmatpush1.bf16.msra.mxu0 %v1201
    %1219 = vmatprep.subr.bf16.mxu0 0
    %1220 = vmatpush1.bf16.msra.mxu0 %v1202
    %1221 = vmatprep.subr.bf16.mxu0 0
    %1222 = vmatpush1.bf16.msra.mxu0 %v1203
    %1223 = vmatprep.subr.bf16.mxu0 0
    %1224 = vmatpush1.bf16.msra.mxu0 %v1204
    %1225 = vmatprep.subr.bf16.mxu0 0
    %1226 = vmatpush1.bf16.msra.mxu0 %v1205
    %1227 = vmatprep.subr.bf16.mxu0 0
    %1228 = vmatpush1.bf16.msra.mxu0 %v1206
    %1229 = vmatprep.subr.bf16.mxu0 0
    %1230 = vmatpush1.bf16.msra.mxu0 %v1207
    %1231 = vmatprep.subr.bf16.mxu0 0
    %1232 = vmatpush1.bf16.msra.mxu0 %v1208
    %1233 = vmatprep.subr.bf16.mxu0 0
    %1234 = vmatpush1.bf16.msra.mxu0 0
    %1235 = vmatprep.subr.bf16.mxu0 0
    %1236 = vmatpush1.bf16.msra.mxu0 0
    %1237 = vmatprep.subr.bf16.mxu0 0
    %1238 = vmatpush1.bf16.msra.mxu0 0
    %1239 = vmatprep.subr.bf16.mxu0 0
    %1240 = vmatpush1.bf16.msra.mxu0 0
    %1241 = vmatprep.subr.bf16.mxu0 0
    %1242 = vmatpush1.bf16.msra.mxu0 0
    %1243 = vmatprep.subr.bf16.mxu0 0
    %1244 = vmatpush1.bf16.msra.mxu0 0
    %1245 = vmatprep.subr.bf16.mxu0 0
    %1246 = vmatpush1.bf16.msra.mxu0 0
    %1247 = vmatprep.subr.bf16.mxu0 0
    %1248 = vmatpush1.bf16.msra.mxu0 0
    %1249 = vmatprep.mubr.bf16.mxu0 0
    %1250 = vmatmul.mubr.bf16.gmra.mrb[0].mxu0 %v1145
    %v1251 = vpop.f32.mrb[0].mxu0
    %v1252 = vadd.f32 %v1167, %v1251
    %v1253 = vpop.f32.mrb[0].mxu0
    %v1254 = vpop.f32.mrb[0].mxu0
    %v1255 = vpop.f32.mrb[0].mxu0
    %1256 = vdwg.mxu0
    %1257 = vmax.xlane.f32.xlu0 %v1252
    %v1258 = vpop.xlane.xlu0 %1257
    %v1259 = vsub.f32 %v1252, %v1258
    %v1260 = vmul.f32 %v1259, 1.442695
    %v1261 = vpow.pop %v1260
    %1262 = vadd.xlane.f32.xlu0 %v1261
    %v1263 = vpop.xlane.xlu0 %1262
    %v1264 = vrcp.pop %v1263
    %v1265 = vmul.f32 %v1261, %v1264
    %1266 = vst [vmem:[#allocation8] sm:$0xff] %v1265
    // Predicated region
    $region26: #{tpu_custom_call.1} parent=1 // pred_check
      _
    $region27: #{tpu_custom_call.1} parent=1 // pred_check_branch
      %1268 = sbr.rel (0) target = $region29
    $region28: #{tpu_custom_call.1} parent=1 // pred_region
      %s1270 = ssub.s32 128, 128
      %1271 = vsyncadd [#allocation4], %s1270
      %s1273 = sshll.u32 [#allocation8], 4
      %s1274 = int_to_ptr.vmem [resolvable:$true] %s1273
      %1276 = dma.vmem_to_hbm [thread:$0]  %s1274, 128, %s3, [#allocation4]
    $region29: #{tpu_custom_call.1} parent=1 // pred_fallthru
      _
    // Predicated region
    $region30: #{tpu_custom_call.1} parent=1 // pred_check
      _
    $region31: #{tpu_custom_call.1} parent=1 // pred_check_branch
      %1278 = sbr.rel (0) target = $region33
    $region32: #{tpu_custom_call.1} parent=1 // pred_region
      %1279 = dma.done [#allocation4], 128
    $region33: #{tpu_custom_call.1} parent=1 // pred_fallthru
      _
    %1280 = vsyncpa [#allocation3], 1
    %1281 = vsyncpa [#allocation6], 1
    %1282 = vsyncpa [#allocation4], 1

</llo_original>
